<compile_context>
chip_gen: v7x
topology: tpu7x:2x2x1
jax: 0.10.0
libtpu: 0.0.40
codegen_flags: <defaults>
</compile_context>

<pallas_src>
import functools
import math

import jax
import jax.numpy as jnp
from jax.experimental import pallas as pl
from jax.experimental.pallas import tpu as pltpu

EPS = 1e-5            # nn.BatchNorm1d default
LIN_WIDTH = 256       # fused pre-BN activation: lanes 0:128 img, 128:192 coord, 192:256 pad
HEAD_WIDTH = 128      # lane-padded MLP head width


# --------------------------- stage 1: linear + BN statistics ---------------------------

def _stage1_lin_stats_kernel(coords_ref, now_img_ref, map_text_ref, wimg_ref, vec_ref,
                             lin_ref, stats_ref, *, inv_n):
    i = pl.program_id(0)

    # ---- image branch: bf16 MXU matmul, f32 accumulation ------------------------------
    # *1000 folded into the f32 activation (bf16-safe); pre-BN bias dropped (cancels).
    feat_diff = (now_img_ref[...].astype(jnp.float32)
                 - map_text_ref[...].astype(jnp.float32)) * 1000.0
    img_lin = jnp.dot(feat_diff.astype(jnp.bfloat16), wimg_ref[...],
                      preferred_element_type=jnp.float32)                    # (T, 128)

    # ---- coordinate branch: K=2 contraction as two VPU FMAs in f32 --------------------
    coords = coords_ref[...]                                                 # (T, 4)
    c_now_x, c_now_y = coords[:, 0:1], coords[:, 1:2]
    c_map_x, c_map_y = coords[:, 2:3], coords[:, 3:4]
    mask = jnp.logical_and(c_now_x == 0.0, c_now_y == 0.0)                   # (T, 1)
    d0 = jnp.where(mask, jnp.float32(199999.0), c_now_x - c_map_x)
    d1 = jnp.where(mask, jnp.float32(199999.0), c_now_y - c_map_y)
    coord_lin = d0 * vec_ref[0:1, 0:128] + d1 * vec_ref[1:2, 0:128]          # (T,128), lanes>=64 zero

    # fused pre-BN activation (lane concat at a 128 boundary: pure layout, no XLU shuffle)
    lin = jnp.concatenate([img_lin, coord_lin], axis=-1)                     # (T, 256)
    lin_ref[...] = lin

    # ---- BN pass 1: per-lane sum / sum-of-squares into the resident stats block -------
    @pl.when(i == 0)
    def _init():
        stats_ref[...] = jnp.zeros_like(stats_ref)

    sums = jnp.concatenate([jnp.sum(lin, axis=0, keepdims=True),
                            jnp.sum(lin * lin, axis=0, keepdims=True)], axis=0)
    stats_ref[...] += sums

    # ---- finalize: fold batch stats + affine into one FMA (scale, shift) --------------
    @pl.when(i == pl.num_programs(0) - 1)
    def _finalize():
        mean = stats_ref[0:1, :] * inv_n
        var = jnp.maximum(stats_ref[1:2, :] * inv_n - mean * mean, 0.0)
        scale = vec_ref[2:3, :] * jax.lax.rsqrt(var + EPS)    # gamma * rsqrt(var+eps), EUP
        shift = vec_ref[3:4, :] - mean * scale                # beta  - mean*scale
        stats_ref[...] = jnp.concatenate([scale, shift], axis=0)


# --------------------------- stage 2: normalize + MLP head -----------------------------

def _stage2_head_kernel(lin_ref, stats_ref, hmat_ref, vec_ref, out_ref):
    # training-mode BatchNorm as a single FMA (padded lanes have scale=shift=0 -> stay 0)
    x = lin_ref[...] * stats_ref[0:1, :] + stats_ref[1:2, :]                 # (T, 256)

    w1 = hmat_ref[0:256, :]        # map_fc1, rows 0:128 img / 128:192 coord, cols 0:64 valid
    w2 = hmat_ref[256:384, :]      # map_fc2, rows 0:64, cols 0:32 valid
    b1, b2, w3 = vec_ref[0:1, :], vec_ref[1:2, :], vec_ref[2:3, :]
    b3 = vec_ref[3:4, 0:1]

    h1 = jnp.maximum(jnp.dot(x, w1, preferred_element_type=jnp.float32) + b1, 0.0)   # (T,128)
    h2 = jnp.maximum(jnp.dot(h1, w2, preferred_element_type=jnp.float32) + b2, 0.0)  # (T,128)
    # final 32->1 head: VPU multiply + lane reduction instead of an N-out=1 MXU matmul
    out_ref[...] = jnp.sum(h2 * w3, axis=-1, keepdims=True) + b3                     # (T, 1)


# --------------------------------- wrapper ---------------------------------------------

def _pick_tile_n(n):
    # biggest sublane-aligned tile that divides N (padding rows would corrupt BN stats);
    # at realistic CLIP dims prefer 512-2048 (v6e) / cap by 64 MiB VMEM (v7x).
    for t in (2048, 1024, 512, 256, 128, 64, 32, 16, 8):
        if n % t == 0:
            return t
    return n   # tiny / ragged batch: single tile


def traffic_sign_encoder_forward(now_coord, map_coord, now_img, map_text, packed, *, tile_n=None):
    n, dimg = now_img.shape
    if tile_n is None:
        tile_n = _pick_tile_n(n)
    assert n % tile_n == 0, "tile_n must divide N (exact full-batch BN statistics)"
    num_tiles = n // tile_n

    # 2 coord tensors packed into one (N,4) input; CLIP features stored bf16 in HBM.
    coords = jnp.concatenate([now_coord[:, :2], map_coord[:, :2]], axis=1).astype(jnp.float32)
    now_img_b = now_img.astype(jnp.bfloat16)
    map_text_b = map_text.astype(jnp.bfloat16)

    tiled = lambda shape: pl.BlockSpec(shape, lambda i: (i, 0))
    const = lambda shape: pl.BlockSpec(shape, lambda i: (0, 0))   # DMA once, VMEM-resident

    lin, stats = pl.pallas_call(
        functools.partial(_stage1_lin_stats_kernel, inv_n=1.0 / n),
        grid=(num_tiles,),
        in_specs=[tiled((tile_n, 4)),
                  tiled((tile_n, dimg)),
                  tiled((tile_n, dimg)),
                  const(packed["wimg"].shape),
                  const(packed["vec1"].shape)],
        out_specs=(tiled((tile_n, LIN_WIDTH)),
                   const((2, LIN_WIDTH))),
        out_shape=(jax.ShapeDtypeStruct((n, LIN_WIDTH), jnp.float32),
                   jax.ShapeDtypeStruct((2, LIN_WIDTH), jnp.float32)),
        compiler_params=pltpu.CompilerParams(
            dimension_semantics=("arbitrary",),          # stats accumulate across N tiles
            vmem_limit_bytes=64 * 1024 * 1024),
        cost_estimate=pl.CostEstimate(
            flops=2 * n * dimg * 128 + 12 * n * LIN_WIDTH,
            transcendentals=LIN_WIDTH,
            bytes_accessed=(n * 4 * 4 + 2 * n * dimg * 2 + n * LIN_WIDTH * 4
                            + packed["wimg"].size * 2 + packed["vec1"].size * 4
                            + 2 * LIN_WIDTH * 4)),
    )(coords, now_img_b, map_text_b, packed["wimg"], packed["vec1"])

    out = pl.pallas_call(
        _stage2_head_kernel,
        grid=(num_tiles,),
        in_specs=[tiled((tile_n, LIN_WIDTH)),
                  const((2, LIN_WIDTH)),
                  const(packed["hmat"].shape),
                  const(packed["vec2"].shape)],
        out_specs=tiled((tile_n, 1)),
        out_shape=jax.ShapeDtypeStruct((n, 1), jnp.float32),
        compiler_params=pltpu.CompilerParams(
            dimension_semantics=("parallel",),           # independent tiles -> megacore
            vmem_limit_bytes=64 * 1024 * 1024),
        cost_estimate=pl.CostEstimate(
            flops=2 * n * LIN_WIDTH * HEAD_WIDTH + 2 * n * HEAD_WIDTH * HEAD_WIDTH
                  + 6 * n * HEAD_WIDTH,
            transcendentals=0,
            bytes_accessed=(n * LIN_WIDTH * 4 + 2 * LIN_WIDTH * 4
                            + packed["hmat"].size * 4 + packed["vec2"].size * 4 + n * 4)),
    )(lin, stats, packed["hmat"], packed["vec2"])
    return out


# ----------------------------- parameter construction -----------------------------------

def kaiming_normal(key, out_dim, in_dim):
    # torch.nn.init.kaiming_normal_(weight, nonlinearity='relu'); weight shape (out, in)
    std = math.sqrt(2.0 / in_dim)
    return jax.random.normal(key, (out_dim, in_dim), dtype=jnp.float32) * std


def make_raw_params(key, coordinates_dim, image_dim):
    """Torch-layout parameters. The module zero-inits biases / BN beta and gamma=1; small
    random values are used here so the bias-cancellation / folding paths are actually
    exercised by the correctness check (forward semantics are identical either way)."""
    ks = jax.random.split(key, 14)
    rnd = lambda k, shape: 0.1 * jax.random.normal(k, shape, dtype=jnp.float32)
    return {
        "w_coord": kaiming_normal(ks[0], 64, coordinates_dim),
        "b_coord": rnd(ks[1], (64,)),
        "w_img": kaiming_normal(ks[2], 128, image_dim),
        "b_img": rnd(ks[3], (128,)),
        "g_coord": 1.0 + rnd(ks[4], (64,)),
        "be_coord": rnd(ks[5], (64,)),
        "g_img": 1.0 + rnd(ks[6], (128,)),
        "be_img": rnd(ks[7], (128,)),
        "w_fc1": kaiming_normal(ks[8], 64, 192),
        "b_fc1": rnd(ks[9], (64,)),
        "w_fc2": kaiming_normal(ks[10], 32, 64),
        "b_fc2": rnd(ks[11], (32,)),
        "w_fc3": kaiming_normal(ks[12], 1, 32),
        "b_fc3": rnd(ks[13], (1,)),
    }


def pack_params(raw, image_dim):
    """Pack parameters into lane-padded, VMEM-resident blocks.

    wimg (Dimg,128) bf16 : image_linear weight^T (the *1000 is folded into the f32
                           activation in-kernel, keeping the bf16 weight well-scaled)
    vec1 (8,256)  f32    : coord weight rows, fused BN gamma/beta over 256 lanes
    hmat (384,128) f32   : [0:256] map_fc1 over the fused 256-lane activation, [256:384] map_fc2
    vec2 (8,128)  f32    : fc1/fc2 biases, fc3 row, fc3 bias
    Pre-BN biases (b_coord, b_img) are dropped: batch-mean subtraction cancels them.
    """
    assert raw["w_coord"].shape[1] >= 2, "forward only consumes coordinates[:2]"
    wimg = raw["w_img"].T.astype(jnp.bfloat16)                     # (Dimg, 128)

    vec1 = jnp.zeros((8, LIN_WIDTH), jnp.float32)
    wct = raw["w_coord"].T                                         # (coord_dim, 64)
    vec1 = vec1.at[0, 0:64].set(wct[0])
    vec1 = vec1.at[1, 0:64].set(wct[1])
    vec1 = vec1.at[2, 0:128].set(raw["g_img"])
    vec1 = vec1.at[2, 128:192].set(raw["g_coord"])
    vec1 = vec1.at[3, 0:128].set(raw["be_img"])
    vec1 = vec1.at[3, 128:192].set(raw["be_coord"])

    hmat = jnp.zeros((384, HEAD_WIDTH), jnp.float32)
    hmat = hmat.at[0:128, 0:64].set(raw["w_fc1"][:, :128].T)       # img_emb rows
    hmat = hmat.at[128:192, 0:64].set(raw["w_fc1"][:, 128:192].T)  # coord_emb rows
    hmat = hmat.at[256:320, 0:32].set(raw["w_fc2"].T)

    vec2 = jnp.zeros((8, HEAD_WIDTH), jnp.float32)
    vec2 = vec2.at[0, 0:64].set(raw["b_fc1"])
    vec2 = vec2.at[1, 0:32].set(raw["b_fc2"])
    vec2 = vec2.at[2, 0:32].set(raw["w_fc3"][0])
    vec2 = vec2.at[3, 0].set(raw["b_fc3"][0])
    return {"wimg": wimg, "vec1": vec1, "hmat": hmat, "vec2": vec2}


# ----------------------------- pure-JAX reference (un-folded math) -----------------------

def reference_forward(now_coord, map_coord, now_img, map_text, raw):
    eps = 1e-5
    mask = jnp.all(now_coord == 0.0, axis=1, keepdims=True)
    coord_diff = jnp.where(mask, 199999.0, now_coord - map_coord)
    feat_diff = (now_img - map_text) * 1000.0

    def bn(x, g, b):
        mu = jnp.mean(x, axis=0, keepdims=True)
        var = jnp.mean((x - mu) ** 2, axis=0, keepdims=True)
        return g * (x - mu) / jnp.sqrt(var + eps) + b

    coord_emb = bn(coord_diff @ raw["w_coord"].T + raw["b_coord"],
                   raw["g_coord"], raw["be_coord"])
    img_emb = bn(feat_diff @ raw["w_img"].T + raw["b_img"],
                 raw["g_img"], raw["be_img"])
    combined = jnp.concatenate([img_emb, coord_emb], axis=-1)
    h1 = jax.nn.relu(combined @ raw["w_fc1"].T + raw["b_fc1"])
    h2 = jax.nn.relu(h1 @ raw["w_fc2"].T + raw["b_fc2"])
    return h2 @ raw["w_fc3"].T + raw["b_fc3"]


if __name__ == "__main__":
    N = 64             # batch of traffic-sign candidates
    COORD_DIM = 2      # coordinates_dim (forward uses [:2])
    IMAGE_DIM = 32     # CLIP feature dim, small synthetic stand-in
    TILE_N = 16        # 4 grid tiles -> exercises two-pass BN accumulation + pipelining

    key = jax.random.PRNGKey(0)
    k_params, k1, k2, k3, k4 = jax.random.split(key, 5)

    raw = make_raw_params(k_params, COORD_DIM, IMAGE_DIM)
    packed = pack_params(raw, IMAGE_DIM)

    now_coord = jax.random.normal(k1, (N, COORD_DIM), dtype=jnp.float32) * 10.0
    map_coord = jax.random.normal(k2, (N, COORD_DIM), dtype=jnp.float32) * 10.0
    now_img = jax.random.normal(k3, (N, IMAGE_DIM), dtype=jnp.float32) * 0.02
    map_text = jax.random.normal(k4, (N, IMAGE_DIM), dtype=jnp.float32) * 0.02
    # make the CLIP features exactly bf16-representable so the reference sees the same
    # HBM values the kernel streams (remaining mismatch is in-kernel bf16 matmul rounding)
    now_img = now_img.astype(jnp.bfloat16).astype(jnp.float32)
    map_text = map_text.astype(jnp.bfloat16).astype(jnp.float32)
    # exercise the zero-coordinate mask branch on one row
    now_coord = now_coord.at[3].set(jnp.zeros((COORD_DIM,), jnp.float32))

    out = traffic_sign_encoder_forward(now_coord, map_coord, now_img, map_text, packed,
                                       tile_n=TILE_N)
    out = jax.block_until_ready(out)

    ref = reference_forward(now_coord, map_coord, now_img, map_text, raw)
    assert out.shape == (N, 1), out.shape
    # tolerance accounts for bf16 operands on the Dimg->128 matmul (BN math stays f32)
    assert jnp.allclose(out, ref, atol=5e-2, rtol=5e-2), (out, ref)

    print("KERNEL_OK")
</pallas_src>

<mosaic_0001>
module attributes {stable_mosaic.version = 11 : i64} {
  func.func @_stage1_lin_stats_kernel(%arg0: i32, %arg1: memref<16x4xf32, #tpu.memory_space<vmem>>, %arg2: memref<16x32xbf16, #tpu.memory_space<vmem>>, %arg3: memref<16x32xbf16, #tpu.memory_space<vmem>>, %arg4: memref<32x128xbf16, #tpu.memory_space<vmem>>, %arg5: memref<8x256xf32, #tpu.memory_space<vmem>>, %arg6: memref<16x256xf32, #tpu.memory_space<vmem>>, %arg7: memref<2x256xf32, #tpu.memory_space<vmem>>) attributes {dimension_semantics = [#tpu.dimension_semantics<arbitrary>], iteration_bounds = array<i64: 4>, scalar_prefetch = 0 : i64, scratch_operands = 0 : i64, tpu.core_type = #tpu.core_type<tc>, window_params = [{transform_indices = @transform_0, window_bounds = array<i64: 16, 4>}, {transform_indices = @transform_1, window_bounds = array<i64: 16, 32>}, {transform_indices = @transform_2, window_bounds = array<i64: 16, 32>}, {pipeline_mode = #tpu.pipeline_mode<synchronous>, transform_indices = @transform_3, window_bounds = array<i64: 32, 128>}, {pipeline_mode = #tpu.pipeline_mode<synchronous>, transform_indices = @transform_4, window_bounds = array<i64: 8, 256>}, {transform_indices = @transform_5, window_bounds = array<i64: 16, 256>}, {pipeline_mode = #tpu.pipeline_mode<synchronous>, transform_indices = @transform_6, window_bounds = array<i64: 2, 256>}]} {
    %c0 = arith.constant 0 : index
    %c0_0 = arith.constant 0 : index
    %0 = vector.load %arg2[%c0, %c0_0] : memref<16x32xbf16, #tpu.memory_space<vmem>>, vector<16x32xbf16>
    %1 = arith.extf %0 : vector<16x32xbf16> to vector<16x32xf32>
    %c0_1 = arith.constant 0 : index
    %c0_2 = arith.constant 0 : index
    %2 = vector.load %arg3[%c0_1, %c0_2] : memref<16x32xbf16, #tpu.memory_space<vmem>>, vector<16x32xbf16>
    %3 = arith.extf %2 : vector<16x32xbf16> to vector<16x32xf32>
    %4 = arith.subf %1, %3 : vector<16x32xf32>
    %cst = arith.constant 1.000000e+03 : f32
    %5 = vector.broadcast %cst : f32 to vector<16x32xf32>
    %6 = arith.mulf %4, %5 : vector<16x32xf32>
    %7 = arith.truncf %6 : vector<16x32xf32> to vector<16x32xbf16>
    %c0_3 = arith.constant 0 : index
    %c0_4 = arith.constant 0 : index
    %8 = vector.load %arg4[%c0_3, %c0_4] : memref<32x128xbf16, #tpu.memory_space<vmem>>, vector<32x128xbf16>
    %cst_5 = arith.constant dense<0.000000e+00> : vector<16x128xf32>
    %9 = tpu.matmul %7, %8, %cst_5 {dimension_numbers = #tpu.dot_dimension_numbers<[1], [0], [0], [1], [0, 0, 1, 1], [], []>} : vector<16x32xbf16>, vector<32x128xbf16>, vector<16x128xf32> -> vector<16x128xf32>
    %c0_6 = arith.constant 0 : index
    %c0_7 = arith.constant 0 : index
    %10 = vector.load %arg1[%c0_6, %c0_7] : memref<16x4xf32, #tpu.memory_space<vmem>>, vector<16x4xf32>
    %11 = vector.extract_strided_slice %10 {offsets = [0, 0], sizes = [16, 1], strides = [1, 1]} : vector<16x4xf32> to vector<16x1xf32>
    %12 = vector.extract_strided_slice %10 {offsets = [0, 1], sizes = [16, 1], strides = [1, 1]} : vector<16x4xf32> to vector<16x1xf32>
    %13 = vector.extract_strided_slice %10 {offsets = [0, 2], sizes = [16, 1], strides = [1, 1]} : vector<16x4xf32> to vector<16x1xf32>
    %14 = vector.extract_strided_slice %10 {offsets = [0, 3], sizes = [16, 1], strides = [1, 1]} : vector<16x4xf32> to vector<16x1xf32>
    %cst_8 = arith.constant 0.000000e+00 : f32
    %15 = vector.broadcast %cst_8 : f32 to vector<16x1xf32>
    %16 = arith.cmpf oeq, %11, %15 : vector<16x1xf32>
    %cst_9 = arith.constant 0.000000e+00 : f32
    %17 = vector.broadcast %cst_9 : f32 to vector<16x1xf32>
    %18 = arith.cmpf oeq, %12, %17 : vector<16x1xf32>
    %19 = arith.andi %16, %18 : vector<16x1xi1>
    %20 = arith.subf %11, %13 : vector<16x1xf32>
    %cst_10 = arith.constant 1.999990e+05 : f32
    %21 = vector.broadcast %cst_10 : f32 to vector<16x1xf32>
    %22 = arith.select %19, %21, %20 : vector<16x1xi1>, vector<16x1xf32>
    %23 = arith.subf %12, %14 : vector<16x1xf32>
    %cst_11 = arith.constant 1.999990e+05 : f32
    %24 = vector.broadcast %cst_11 : f32 to vector<16x1xf32>
    %25 = arith.select %19, %24, %23 : vector<16x1xi1>, vector<16x1xf32>
    %c0_12 = arith.constant 0 : index
    %c0_13 = arith.constant 0 : index
    %26 = vector.load %arg5[%c0_12, %c0_13] : memref<8x256xf32, #tpu.memory_space<vmem>>, vector<1x128xf32>
    %27 = vector.broadcast %22 : vector<16x1xf32> to vector<16x128xf32>
    %28 = vector.broadcast %26 : vector<1x128xf32> to vector<16x128xf32>
    %29 = arith.mulf %27, %28 : vector<16x128xf32>
    %c1 = arith.constant 1 : index
    %c0_14 = arith.constant 0 : index
    %30 = vector.load %arg5[%c1, %c0_14] : memref<8x256xf32, #tpu.memory_space<vmem>>, vector<1x128xf32>
    %31 = vector.broadcast %25 : vector<16x1xf32> to vector<16x128xf32>
    %32 = vector.broadcast %30 : vector<1x128xf32> to vector<16x128xf32>
    %33 = arith.mulf %31, %32 : vector<16x128xf32>
    %34 = arith.addf %29, %33 : vector<16x128xf32>
    %35 = tpu.concatenate %9, %34 in 1 : vector<16x128xf32>, vector<16x128xf32> -> vector<16x256xf32>
    %c0_15 = arith.constant 0 : index
    %c0_16 = arith.constant 0 : index
    %36 = vector.load %arg6[%c0_15, %c0_16] : memref<16x256xf32, #tpu.memory_space<vmem>>, vector<16x256xf32>
    tpu.vector_store %arg6[%c0_15, %c0_16], %35 {strides = array<i32>} : memref<16x256xf32, #tpu.memory_space<vmem>>, vector<16x256xf32>,
    %c0_i32 = arith.constant 0 : i32
    %37 = arith.cmpi eq, %arg0, %c0_i32 : i32
    %38 = arith.extui %37 : i1 to i32
    %c0_i32_17 = arith.constant 0 : i32
    %39 = arith.cmpi ne, %38, %c0_i32_17 : i32
    scf.if %39 {
      %cst_25 = arith.constant 0.000000e+00 : f32
      %52 = vector.broadcast %cst_25 : f32 to vector<2x256xf32>
      %c0_26 = arith.constant 0 : index
      %c0_27 = arith.constant 0 : index
      %53 = vector.load %arg7[%c0_26, %c0_27] : memref<2x256xf32, #tpu.memory_space<vmem>>, vector<2x256xf32>
      tpu.vector_store %arg7[%c0_26, %c0_27], %52 {strides = array<i32>} : memref<2x256xf32, #tpu.memory_space<vmem>>, vector<2x256xf32>,
    } else {
    }
    %cst_18 = arith.constant dense<0.000000e+00> : vector<256xf32>
    %40 = vector.multi_reduction <add>, %35, %cst_18 [0] : vector<16x256xf32> to vector<256xf32>
    %41 = vector.shape_cast %40 : vector<256xf32> to vector<1x256xf32>
    %42 = arith.mulf %35, %35 : vector<16x256xf32>
    %cst_19 = arith.constant dense<0.000000e+00> : vector<256xf32>
    %43 = vector.multi_reduction <add>, %42, %cst_19 [0] : vector<16x256xf32> to vector<256xf32>
    %44 = vector.shape_cast %43 : vector<256xf32> to vector<1x256xf32>
    %45 = tpu.concatenate %41, %44 in 0 : vector<1x256xf32>, vector<1x256xf32> -> vector<2x256xf32>
    %c0_20 = arith.constant 0 : index
    %c0_21 = arith.constant 0 : index
    %46 = vector.load %arg7[%c0_20, %c0_21] : memref<2x256xf32, #tpu.memory_space<vmem>>, vector<2x256xf32>
    %47 = arith.addf %46, %45 : vector<2x256xf32>
    %c0_22 = arith.constant 0 : index
    %c0_23 = arith.constant 0 : index
    %48 = vector.load %arg7[%c0_22, %c0_23] : memref<2x256xf32, #tpu.memory_space<vmem>>, vector<2x256xf32>
    tpu.vector_store %arg7[%c0_22, %c0_23], %47 {strides = array<i32>} : memref<2x256xf32, #tpu.memory_space<vmem>>, vector<2x256xf32>,
    %c3_i32 = arith.constant 3 : i32
    %49 = arith.cmpi eq, %arg0, %c3_i32 : i32
    %50 = arith.extui %49 : i1 to i32
    %c0_i32_24 = arith.constant 0 : i32
    %51 = arith.cmpi ne, %50, %c0_i32_24 : i32
    scf.if %51 {
      %c0_25 = arith.constant 0 : index
      %c0_26 = arith.constant 0 : index
      %52 = vector.load %arg7[%c0_25, %c0_26] : memref<2x256xf32, #tpu.memory_space<vmem>>, vector<1x256xf32>
      %cst_27 = arith.constant 1.562500e-02 : f32
      %53 = vector.broadcast %cst_27 : f32 to vector<1x256xf32>
      %54 = arith.mulf %52, %53 : vector<1x256xf32>
      %c1_28 = arith.constant 1 : index
      %c0_29 = arith.constant 0 : index
      %55 = vector.load %arg7[%c1_28, %c0_29] : memref<2x256xf32, #tpu.memory_space<vmem>>, vector<1x256xf32>
      %cst_30 = arith.constant 1.562500e-02 : f32
      %56 = vector.broadcast %cst_30 : f32 to vector<1x256xf32>
      %57 = arith.mulf %55, %56 : vector<1x256xf32>
      %58 = arith.mulf %54, %54 : vector<1x256xf32>
      %59 = arith.subf %57, %58 : vector<1x256xf32>
      %cst_31 = arith.constant 0.000000e+00 : f32
      %60 = vector.broadcast %cst_31 : f32 to vector<1x256xf32>
      %61 = arith.maximumf %59, %60 : vector<1x256xf32>
      %c2 = arith.constant 2 : index
      %c0_32 = arith.constant 0 : index
      %62 = vector.load %arg5[%c2, %c0_32] : memref<8x256xf32, #tpu.memory_space<vmem>>, vector<1x256xf32>
      %cst_33 = arith.constant 9.99999974E-6 : f32
      %63 = vector.broadcast %cst_33 : f32 to vector<1x256xf32>
      %64 = arith.addf %61, %63 : vector<1x256xf32>
      %65 = math.rsqrt %64 : vector<1x256xf32>
      %66 = arith.mulf %62, %65 : vector<1x256xf32>
      %c3 = arith.constant 3 : index
      %c0_34 = arith.constant 0 : index
      %67 = vector.load %arg5[%c3, %c0_34] : memref<8x256xf32, #tpu.memory_space<vmem>>, vector<1x256xf32>
      %68 = arith.mulf %54, %66 : vector<1x256xf32>
      %69 = arith.subf %67, %68 : vector<1x256xf32>
      %70 = tpu.concatenate %66, %69 in 0 : vector<1x256xf32>, vector<1x256xf32> -> vector<2x256xf32>
      %c0_35 = arith.constant 0 : index
      %c0_36 = arith.constant 0 : index
      %71 = vector.load %arg7[%c0_35, %c0_36] : memref<2x256xf32, #tpu.memory_space<vmem>>, vector<2x256xf32>
      tpu.vector_store %arg7[%c0_35, %c0_36], %70 {strides = array<i32>} : memref<2x256xf32, #tpu.memory_space<vmem>>, vector<2x256xf32>,
    } else {
    }
    return
  }
  func.func @transform_0(%arg0: i32) -> (i32, i32) {
    %c0_i32 = arith.constant 0 : i32
    %c0_i32_0 = arith.constant 0 : i32
    return %arg0, %c0_i32 : i32, i32
  }
  func.func @transform_1(%arg0: i32) -> (i32, i32) {
    %c0_i32 = arith.constant 0 : i32
    %c0_i32_0 = arith.constant 0 : i32
    return %arg0, %c0_i32 : i32, i32
  }
  func.func @transform_2(%arg0: i32) -> (i32, i32) {
    %c0_i32 = arith.constant 0 : i32
    %c0_i32_0 = arith.constant 0 : i32
    return %arg0, %c0_i32 : i32, i32
  }
  func.func @transform_3(%arg0: i32) -> (i32, i32) {
    %c0_i32 = arith.constant 0 : i32
    %c0_i32_0 = arith.constant 0 : i32
    %c0_i32_1 = arith.constant 0 : i32
    return %c0_i32, %c0_i32_0 : i32, i32
  }
  func.func @transform_4(%arg0: i32) -> (i32, i32) {
    %c0_i32 = arith.constant 0 : i32
    %c0_i32_0 = arith.constant 0 : i32
    %c0_i32_1 = arith.constant 0 : i32
    return %c0_i32, %c0_i32_0 : i32, i32
  }
  func.func @transform_5(%arg0: i32) -> (i32, i32) {
    %c0_i32 = arith.constant 0 : i32
    %c0_i32_0 = arith.constant 0 : i32
    return %arg0, %c0_i32 : i32, i32
  }
  func.func @transform_6(%arg0: i32) -> (i32, i32) {
    %c0_i32 = arith.constant 0 : i32
    %c0_i32_0 = arith.constant 0 : i32
    %c0_i32_1 = arith.constant 0 : i32
    return %c0_i32, %c0_i32_0 : i32, i32
  }
}

</mosaic_0001>

<llo_original>
// kernel: tpu_custom_call.1
$region0: #{tpu_custom_call.1}
  #allocation0 [shape = 'u32[]', space=smem, size = 0x4, offset = 0x4, fixed_abs, tag = 'smem constant byte address 0x4 - core index']
  #allocation1 [shape = 'u32[144,128]{1,0:T(1,128)}', space=vmem, size = 0x12000, scoped, tag = 'internal scratch']
  %s0 = inlined_call_operand.hbm [shape: f32[64,4], index: 0, kind: input, shape index: {}]
  %s1 = inlined_call_operand.hbm [shape: bf16[64,32], index: 1, kind: input, shape index: {}]
  %s2 = inlined_call_operand.hbm [shape: bf16[64,32], index: 2, kind: input, shape index: {}]
  %s3 = inlined_call_operand.hbm [shape: bf16[32,128], index: 3, kind: input, shape index: {}]
  %s4 = inlined_call_operand.hbm [shape: f32[8,256], index: 4, kind: input, shape index: {}]
  %s5 = inlined_call_operand.hbm [shape: f32[64,256], index: 5, kind: output, shape index: {0}]
  %s6 = inlined_call_operand.hbm [shape: f32[2,256], index: 6, kind: output, shape index: {1}]
  %7 = xla_tuple %s5, %s6
  %s8 = sld [smem:[#allocation0]]
  $region89: #{tpu_custom_call.1} parent=0
    _
  %s10 = ssub.s32 1, %s8
  %s11 = scalar_select 0, %s10, %s8
  $region1: #{tpu_custom_call.1} parent=0
    #allocation2 [shape = 'u8[16384]{0}', space=vmem, size = 0x4000, scoped, tag = 'input window, operand 0']
    #allocation3 [shape = 's32[2]{0}', space=sflag, size = 0x8, scoped, tag = 'scoped memory for tpu_custom_call.1']
    #allocation4 [shape = 's32[2]{0}', space=sflag, size = 0x8, scoped, tag = 'scoped memory for tpu_custom_call.1']
    #allocation5 [shape = 'u8[8192]{0}', space=vmem, size = 0x2000, scoped, tag = 'input window, operand 1']
    #allocation6 [shape = 's32[2]{0}', space=sflag, size = 0x8, scoped, tag = 'scoped memory for tpu_custom_call.1']
    #allocation7 [shape = 'u8[8192]{0}', space=vmem, size = 0x2000, scoped, tag = 'input window, operand 2']
    #allocation8 [shape = 'u8[8192]{0}', space=vmem, size = 0x2000, scoped, tag = 'input window, operand 3, single buffered']
    #allocation9 [shape = 's32[1]{0}', space=sflag, size = 0x4, scoped, tag = 'scoped memory for tpu_custom_call.1']
    #allocation10 [shape = 'u8[8192]{0}', space=vmem, size = 0x2000, scoped, tag = 'input window, operand 4, single buffered']
    #allocation11 [shape = 'u8[32768]{0}', space=vmem, size = 0x8000, scoped, tag = 'output window, operand 0']
    #allocation12 [shape = 'u8[2048]{0}', space=vmem, size = 0x800, scoped, tag = 'output window, operand 1, single buffered']
    #allocation13 [shape = 's32[1]{0}', space=sflag, size = 0x4, scoped, tag = 'scoped memory for tpu_custom_call.1']
    %12 = vsyncpa [#allocation3], 0
    %s13 = scalar_lea.sflag [#allocation3], 1
    %14 = vsyncpa %s13, 0
    %15 = vsyncpa [#allocation6], 0
    %s16 = scalar_lea.sflag [#allocation6], 1
    %17 = vsyncpa %s16, 0
    %18 = vsyncpa [#allocation9], 0
    %19 = vsyncpa [#allocation4], 0
    %s20 = scalar_lea.sflag [#allocation4], 1
    %21 = vsyncpa %s20, 0
    %22 = vsyncpa [#allocation13], 0
    loop: start=0, step=1, limit=6
    $region2: #{tpu_custom_call.1} parent=1 // loop_pre_header
      _
    $region3: #{tpu_custom_call.1} parent=1 // loop_header
      %s24 = sphi 0, %s28
      %p25 = scmp.ge.s32.totalorder %s24, 6
      %s34 = sphi 0, %s36
      %s37 = sphi 0, %s34
      %s38 = sphi 0, %s37
      %s54 = sphi 0, %s38
      %s60 = sphi 0, %s62
      %s63 = sphi 0, %s60
      %s64 = sphi 0, %s63
      %s80 = sphi 0, %s64
      %s86 = sphi 0, %s88
      %s89 = sphi 0, %s86
      %s90 = sphi 0, %s89
      %s106 = sphi 0, %s90
      %s110 = sphi 0, %s110
      %s112 = sphi 0, %s110
      %s113 = sphi 0, %s112
      %s127 = sphi 0, %s113
      %s131 = sphi 0, %s131
      %s133 = sphi 0, %s131
      %s134 = sphi 0, %s133
      %s148 = sphi 0, %s134
      %s154 = sphi 0, %s156
      %s157 = sphi 0, %s154
      %s158 = sphi 0, %s157
      %s174 = sphi 0, %s158
      %s178 = sphi 0, %s178
      %s180 = sphi 0, %s178
      %s181 = sphi 0, %s180
      %s195 = sphi 0, %s181
    $region4: #{tpu_custom_call.1} parent=1 // loop_header_branch
      %27 = sbr.rel (%p25) target = $region8
    $region5: #{tpu_custom_call.1} parent=1 // loop_body
      %s29 = ssub.s32 %s24, 1
      %s30 = ssub.s32 %s24, 2
      %s31 = sadd.s32 %s24, 1
      %s32 = ssub.s32 %s24, %s31
      %p33 = scmp.eq.s32.totalorder %s32, 0
      %s35 = sadd.s32 %s34, 1
      %s36 = scalar_select %p33, %s34, %s35
      %p39 = pneg %p33
      %p40 = scmp.eq.s32.totalorder %s24, 3
      %p41 = por %p39, %p40
      %p42 = scmp.ne.s32.totalorder %s34, %s37
      %p43 = scmp.eq.s32.totalorder %s24, 0
      %p44 = por %p42, %p43
      %p45 = scmp.ne.s32.totalorder %s34, %s37
      %p46 = scmp.eq.s32.totalorder %s29, 3
      %p47 = por %p45, %p46
      %p48 = scmp.ne.s32.totalorder %s37, %s38
      %p49 = scmp.eq.s32.totalorder %s29, 0
      %p50 = por %p48, %p49
      %p51 = scmp.ne.s32.totalorder %s37, %s38
      %p52 = scmp.eq.s32.totalorder %s30, 3
      %p53 = por %p51, %p52
      %p55 = scmp.ne.s32.totalorder %s38, %s54
      %p56 = scmp.eq.s32.totalorder %s30, 0
      %p57 = por %p55, %p56
      %s58 = ssub.s32 %s24, %s31
      %p59 = scmp.eq.s32.totalorder %s58, 0
      %s61 = sadd.s32 %s60, 1
      %s62 = scalar_select %p59, %s60, %s61
      %p65 = pneg %p59
      %p66 = scmp.eq.s32.totalorder %s24, 3
      %p67 = por %p65, %p66
      %p68 = scmp.ne.s32.totalorder %s60, %s63
      %p69 = scmp.eq.s32.totalorder %s24, 0
      %p70 = por %p68, %p69
      %p71 = scmp.ne.s32.totalorder %s60, %s63
      %p72 = scmp.eq.s32.totalorder %s29, 3
      %p73 = por %p71, %p72
      %p74 = scmp.ne.s32.totalorder %s63, %s64
      %p75 = scmp.eq.s32.totalorder %s29, 0
      %p76 = por %p74, %p75
      %p77 = scmp.ne.s32.totalorder %s63, %s64
      %p78 = scmp.eq.s32.totalorder %s30, 3
      %p79 = por %p77, %p78
      %p81 = scmp.ne.s32.totalorder %s64, %s80
      %p82 = scmp.eq.s32.totalorder %s30, 0
      %p83 = por %p81, %p82
      %s84 = ssub.s32 %s24, %s31
      %p85 = scmp.eq.s32.totalorder %s84, 0
      %s87 = sadd.s32 %s86, 1
      %s88 = scalar_select %p85, %s86, %s87
      %p91 = pneg %p85
      %p92 = scmp.eq.s32.totalorder %s24, 3
      %p93 = por %p91, %p92
      %p94 = scmp.ne.s32.totalorder %s86, %s89
      %p95 = scmp.eq.s32.totalorder %s24, 0
      %p96 = por %p94, %p95
      %p97 = scmp.ne.s32.totalorder %s86, %s89
      %p98 = scmp.eq.s32.totalorder %s29, 3
      %p99 = por %p97, %p98
      %p100 = scmp.ne.s32.totalorder %s89, %s90
      %p101 = scmp.eq.s32.totalorder %s29, 0
      %p102 = por %p100, %p101
      %p103 = scmp.ne.s32.totalorder %s89, %s90
      %p104 = scmp.eq.s32.totalorder %s30, 3
      %p105 = por %p103, %p104
      %p107 = scmp.ne.s32.totalorder %s90, %s106
      %p108 = scmp.eq.s32.totalorder %s30, 0
      %p109 = por %p107, %p108
      %s111 = sadd.s32 %s110, 1
      %p114 = scmp.eq.s32.totalorder %s24, 3
      %p115 = scmp.ne.s32.totalorder %s110, %s112
      %p116 = scmp.eq.s32.totalorder %s24, 0
      %p117 = por %p115, %p116
      %p118 = scmp.ne.s32.totalorder %s110, %s112
      %p119 = scmp.eq.s32.totalorder %s29, 3
      %p120 = por %p118, %p119
      %p121 = scmp.ne.s32.totalorder %s112, %s113
      %p122 = scmp.eq.s32.totalorder %s29, 0
      %p123 = por %p121, %p122
      %p124 = scmp.ne.s32.totalorder %s112, %s113
      %p125 = scmp.eq.s32.totalorder %s30, 3
      %p126 = por %p124, %p125
      %p128 = scmp.ne.s32.totalorder %s113, %s127
      %p129 = scmp.eq.s32.totalorder %s30, 0
      %p130 = por %p128, %p129
      %s132 = sadd.s32 %s131, 1
      %p135 = scmp.eq.s32.totalorder %s24, 3
      %p136 = scmp.ne.s32.totalorder %s131, %s133
      %p137 = scmp.eq.s32.totalorder %s24, 0
      %p138 = por %p136, %p137
      %p139 = scmp.ne.s32.totalorder %s131, %s133
      %p140 = scmp.eq.s32.totalorder %s29, 3
      %p141 = por %p139, %p140
      %p142 = scmp.ne.s32.totalorder %s133, %s134
      %p143 = scmp.eq.s32.totalorder %s29, 0
      %p144 = por %p142, %p143
      %p145 = scmp.ne.s32.totalorder %s133, %s134
      %p146 = scmp.eq.s32.totalorder %s30, 3
      %p147 = por %p145, %p146
      %p149 = scmp.ne.s32.totalorder %s134, %s148
      %p150 = scmp.eq.s32.totalorder %s30, 0
      %p151 = por %p149, %p150
      %s152 = ssub.s32 %s24, %s31
      %p153 = scmp.eq.s32.totalorder %s152, 0
      %s155 = sadd.s32 %s154, 1
      %s156 = scalar_select %p153, %s154, %s155
      %p159 = pneg %p153
      %p160 = scmp.eq.s32.totalorder %s24, 3
      %p161 = por %p159, %p160
      %p162 = scmp.ne.s32.totalorder %s154, %s157
      %p163 = scmp.eq.s32.totalorder %s24, 0
      %p164 = por %p162, %p163
      %p165 = scmp.ne.s32.totalorder %s154, %s157
      %p166 = scmp.eq.s32.totalorder %s29, 3
      %p167 = por %p165, %p166
      %p168 = scmp.ne.s32.totalorder %s157, %s158
      %p169 = scmp.eq.s32.totalorder %s29, 0
      %p170 = por %p168, %p169
      %p171 = scmp.ne.s32.totalorder %s157, %s158
      %p172 = scmp.eq.s32.totalorder %s30, 3
      %p173 = por %p171, %p172
      %p175 = scmp.ne.s32.totalorder %s158, %s174
      %p176 = scmp.eq.s32.totalorder %s30, 0
      %p177 = por %p175, %p176
      %s179 = sadd.s32 %s178, 1
      %p182 = scmp.eq.s32.totalorder %s24, 3
      %p183 = scmp.ne.s32.totalorder %s178, %s180
      %p184 = scmp.eq.s32.totalorder %s24, 0
      %p185 = por %p183, %p184
      %p186 = scmp.ne.s32.totalorder %s178, %s180
      %p187 = scmp.eq.s32.totalorder %s29, 3
      %p188 = por %p186, %p187
      %p189 = scmp.ne.s32.totalorder %s180, %s181
      %p190 = scmp.eq.s32.totalorder %s29, 0
      %p191 = por %p189, %p190
      %p192 = scmp.ne.s32.totalorder %s180, %s181
      %p193 = scmp.eq.s32.totalorder %s30, 3
      %p194 = por %p192, %p193
      %p196 = scmp.ne.s32.totalorder %s181, %s195
      %p197 = scmp.eq.s32.totalorder %s30, 0
      %p198 = por %p196, %p197
      %p199 = scmp.le.s32.totalorder 1, %s24
      %p200 = scmp.lt.s32.totalorder %s24, 5
      %p201 = pnand %p199, %p200
      %p202 = pneg %p201
      // Predicated region
      $region9: #{tpu_custom_call.1} parent=5 // pred_check
        _
      $region10: #{tpu_custom_call.1} parent=5 // pred_check_branch
        %204 = sbr.rel (%p201) target = $region12
      $region11: #{tpu_custom_call.1} parent=5 // pred_region
        %s205 = ssub.s32 %s24, 1
        // Predicated region
        $region13: #{tpu_custom_call.1} parent=11 // pred_check
          %p206 = pneg %p123
        $region14: #{tpu_custom_call.1} parent=11 // pred_check_branch
          %208 = sbr.rel (%p206) target = $region16
        $region15: #{tpu_custom_call.1} parent=11 // pred_region
          %s210 = ssub.s32 256, 256
          %211 = vsyncadd [#allocation9], %s210
          %s212 = sshll.u32 [#allocation8], 4
          %s213 = int_to_ptr.vmem [resolvable:$true] %s212
          %218 = dma.hbm_to_vmem [thread:$0]  %s3, 256, %s213, [#allocation9], 64, 64, 4
        $region16: #{tpu_custom_call.1} parent=11 // pred_fallthru
          _
        // Predicated region
        $region17: #{tpu_custom_call.1} parent=11 // pred_check
          %p219 = pneg %p144
        $region18: #{tpu_custom_call.1} parent=11 // pred_check_branch
          %221 = sbr.rel (%p219) target = $region20
        $region19: #{tpu_custom_call.1} parent=11 // pred_region
          %s223 = ssub.s32 256, 256
          %224 = vsyncadd [#allocation9], %s223
          %s226 = sshll.u32 [#allocation10], 4
          %s227 = int_to_ptr.vmem [resolvable:$true] %s226
          %229 = dma.hbm_to_vmem [thread:$0]  %s4, 256, %s227, [#allocation9]
        $region20: #{tpu_custom_call.1} parent=11 // pred_fallthru
          _
      $region12: #{tpu_custom_call.1} parent=5 // pred_fallthru
        _
      %p230 = scmp.lt.s32.totalorder %s24, 4
      // Predicated region
      $region21: #{tpu_custom_call.1} parent=5 // pred_check
        %p231 = pneg %p230
      $region22: #{tpu_custom_call.1} parent=5 // pred_check_branch
        %233 = sbr.rel (%p231) target = $region24
      $region23: #{tpu_custom_call.1} parent=5 // pred_region
        // Predicated region
        $region25: #{tpu_custom_call.1} parent=23 // pred_check
          %p234 = pneg %p44
        $region26: #{tpu_custom_call.1} parent=23 // pred_check_branch
          %236 = sbr.rel (%p234) target = $region28
        $region27: #{tpu_custom_call.1} parent=23 // pred_region
          %s237 = sand.u32 %s34, 1
          %s238 = scalar_lea.sflag [#allocation3], %s237
          %s239 = sand.u32 %s34, 1
          %s240 = smul.addr %s239, 16
          %s241 = scalar_lea.vmem [#allocation2], %s240
          %s242 = smul.u32 2, %s24
          %s244 = ssub.s32 256, 256
          %245 = vsyncadd %s238, %s244
          %s246 = smul.addr %s242, 128
          %s247 = scalar_lea.hbm %s0, %s246
          %s248 = sshll.u32 %s241, 4
          %s249 = int_to_ptr.vmem [resolvable:$true] %s248
          %254 = dma.hbm_to_vmem [thread:$0]  %s247, 256, %s249, %s238, 128, 128, 8
        $region28: #{tpu_custom_call.1} parent=23 // pred_fallthru
          _
        // Predicated region
        $region29: #{tpu_custom_call.1} parent=23 // pred_check
          %p255 = pneg %p70
        $region30: #{tpu_custom_call.1} parent=23 // pred_check_branch
          %257 = sbr.rel (%p255) target = $region32
        $region31: #{tpu_custom_call.1} parent=23 // pred_region
          %s258 = sand.u32 %s24, 1
          %s259 = scalar_lea.sflag [#allocation6], %s258
          %s260 = sand.u32 %s60, 1
          %s261 = smul.addr %s260, 8
          %s262 = scalar_lea.vmem [#allocation5], %s261
          %s263 = smul.u32 2, %s24
          %s265 = ssub.s32 128, 128
          %266 = vsyncadd %s259, %s265
          %s267 = smul.addr %s263, 64
          %s268 = scalar_lea.hbm %s1, %s267
          %s269 = sshll.u32 %s262, 4
          %s270 = int_to_ptr.vmem [resolvable:$true] %s269
          %275 = dma.hbm_to_vmem [thread:$0]  %s268, 128, %s270, %s259, 64, 64, 4
        $region32: #{tpu_custom_call.1} parent=23 // pred_fallthru
          _
        // Predicated region
        $region33: #{tpu_custom_call.1} parent=23 // pred_check
          %p276 = pneg %p96
        $region34: #{tpu_custom_call.1} parent=23 // pred_check_branch
          %278 = sbr.rel (%p276) target = $region36
        $region35: #{tpu_custom_call.1} parent=23 // pred_region
          %s279 = sand.u32 %s24, 1
          %s280 = scalar_lea.sflag [#allocation6], %s279
          %s281 = sand.u32 %s86, 1
          %s282 = smul.addr %s281, 8
          %s283 = scalar_lea.vmem [#allocation7], %s282
          %s284 = smul.u32 2, %s24
          %s286 = ssub.s32 128, 128
          %287 = vsyncadd %s280, %s286
          %s288 = smul.addr %s284, 64
          %s289 = scalar_lea.hbm %s2, %s288
          %s290 = sshll.u32 %s283, 4
          %s291 = int_to_ptr.vmem [resolvable:$true] %s290
          %296 = dma.hbm_to_vmem [thread:$0]  %s289, 128, %s291, %s280, 64, 64, 4
        $region36: #{tpu_custom_call.1} parent=23 // pred_fallthru
          _
      $region24: #{tpu_custom_call.1} parent=5 // pred_fallthru
        _
      %p297 = scmp.le.s32.totalorder 1, %s24
      %p298 = scmp.lt.s32.totalorder %s24, 5
      %p299 = pnand %p297, %p298
      %p300 = pneg %p299
      // Predicated region
      $region37: #{tpu_custom_call.1} parent=5 // pred_check
        _
      $region38: #{tpu_custom_call.1} parent=5 // pred_check_branch
        %302 = sbr.rel (%p299) target = $region40
      $region39: #{tpu_custom_call.1} parent=5 // pred_region
        %s303 = ssub.s32 %s24, 1
        %s304 = sand.u32 %s37, 1
        %s305 = scalar_lea.sflag [#allocation3], %s304
        %s306 = sand.u32 %s37, 1
        %s307 = smul.addr %s306, 16
        %s308 = scalar_lea.vmem [#allocation2], %s307
        // Predicated region
        $region41: #{tpu_custom_call.1} parent=39 // pred_check
          %p309 = pneg %p50
        $region42: #{tpu_custom_call.1} parent=39 // pred_check_branch
          %311 = sbr.rel (%p309) target = $region44
        $region43: #{tpu_custom_call.1} parent=39 // pred_region
          %312 = dma.done %s305, 256
        $region44: #{tpu_custom_call.1} parent=39 // pred_fallthru
          _
        %s313 = sand.u32 %s29, 1
        %s314 = scalar_lea.sflag [#allocation6], %s313
        %s315 = sand.u32 %s63, 1
        %s316 = smul.addr %s315, 8
        %s317 = scalar_lea.vmem [#allocation5], %s316
        // Predicated region
        $region45: #{tpu_custom_call.1} parent=39 // pred_check
          %p318 = pneg %p76
        $region46: #{tpu_custom_call.1} parent=39 // pred_check_branch
          %320 = sbr.rel (%p318) target = $region48
        $region47: #{tpu_custom_call.1} parent=39 // pred_region
          %321 = dma.done %s314, 128
        $region48: #{tpu_custom_call.1} parent=39 // pred_fallthru
          _
        %s322 = sand.u32 %s29, 1
        %s323 = scalar_lea.sflag [#allocation6], %s322
        %s324 = sand.u32 %s89, 1
        %s325 = smul.addr %s324, 8
        %s326 = scalar_lea.vmem [#allocation7], %s325
        // Predicated region
        $region49: #{tpu_custom_call.1} parent=39 // pred_check
          %p327 = pneg %p102
        $region50: #{tpu_custom_call.1} parent=39 // pred_check_branch
          %329 = sbr.rel (%p327) target = $region52
        $region51: #{tpu_custom_call.1} parent=39 // pred_region
          %330 = dma.done %s323, 128
        $region52: #{tpu_custom_call.1} parent=39 // pred_fallthru
          _
        // Predicated region
        $region53: #{tpu_custom_call.1} parent=39 // pred_check
          %p331 = pneg %p123
        $region54: #{tpu_custom_call.1} parent=39 // pred_check_branch
          %333 = sbr.rel (%p331) target = $region56
        $region55: #{tpu_custom_call.1} parent=39 // pred_region
          %334 = dma.done [#allocation9], 256
        $region56: #{tpu_custom_call.1} parent=39 // pred_fallthru
          _
        // Predicated region
        $region57: #{tpu_custom_call.1} parent=39 // pred_check
          %p335 = pneg %p144
        $region58: #{tpu_custom_call.1} parent=39 // pred_check_branch
          %337 = sbr.rel (%p335) target = $region60
        $region59: #{tpu_custom_call.1} parent=39 // pred_region
          %338 = dma.done [#allocation9], 256
        $region60: #{tpu_custom_call.1} parent=39 // pred_fallthru
          _
        %s339 = sand.u32 %s37, 1
        %s340 = scalar_lea.sflag [#allocation3], %s339
        %s341 = sand.u32 %s37, 1
        %s342 = smul.addr %s341, 16
        %s343 = scalar_lea.vmem [#allocation2], %s342
        %p344 = pneg %p50
        %p345 = pneg %p47
        %s346 = sand.u32 %s29, 1
        %s347 = scalar_lea.sflag [#allocation6], %s346
        %s348 = sand.u32 %s63, 1
        %s349 = smul.addr %s348, 8
        %s350 = scalar_lea.vmem [#allocation5], %s349
        %p351 = pneg %p76
        %p352 = pneg %p73
        %s353 = sand.u32 %s29, 1
        %s354 = scalar_lea.sflag [#allocation6], %s353
        %s355 = sand.u32 %s89, 1
        %s356 = smul.addr %s355, 8
        %s357 = scalar_lea.vmem [#allocation7], %s356
        %p358 = pneg %p102
        %p359 = pneg %p99
        %p360 = pneg %p123
        %p361 = pneg %p120
        %p362 = pneg %p144
        %p363 = pneg %p141
        %p364 = pneg %p170
        %p365 = pneg %p167
        %s366 = sand.u32 %s157, 1
        %s367 = scalar_lea.sflag [#allocation4], %s366
        %s368 = sand.u32 %s157, 1
        %s369 = smul.addr %s368, 32
        %s370 = scalar_lea.vmem [#allocation11], %s369
        %p371 = pneg %p191
        %p372 = pneg %p188
        %s373 = smul.u32 2, %s29
        %s374 = smul.u32 2, %s29
        %s375 = smul.u32 2, %s29
        %s376 = smul.u32 2, %s29
        %v378 = vld [vmem:[%s317] sm:$0xf]
        %v379 = vld [vmem:[%s317 + $0x4] sm:$0xf]
        %v380 = vunpack.c.l.bf16 %v378
        %v381 = vunpack.c.l.bf16 %v379
        %v382 = vld [vmem:[%s326] sm:$0xf]
        %v383 = vld [vmem:[%s326 + $0x4] sm:$0xf]
        %v384 = vunpack.c.l.bf16 %v382
        %v385 = vunpack.c.l.bf16 %v383
        %v386 = vsub.f32 %v380, %v384
        %v387 = vsub.f32 %v381, %v385
        %v388 = vmul.f32 %v386, 1000.0
        %v389 = vmul.f32 %v387, 1000.0
        %v390 = vpack.c.bf16 %v389, %v388
        %v391 = vld [vmem:[#allocation8] sm:$0xf]
        %v392 = vld [vmem:[#allocation8 + $0x4] sm:$0xf]
        %v393 = vld [vmem:[#allocation8 + $0x8] sm:$0xf]
        %v394 = vld [vmem:[#allocation8 + $0xc] sm:$0xf]
        %v399 = vunpack.c.l.b16 %v391
        %v400 = vunpack.c.l.b16 %v392
        %v401 = vunpack.c.l.b16 %v393
        %v402 = vunpack.c.l.b16 %v394
        %v403 = vpack.c.b16 %v400, %v399
        %v404 = vpack.c.b16 %v402, %v401
        %vm407 = vcmask 261120
        %v409 = vsel %vm407, %v390, 0
        %411 = vmatprep.subr.bf16.mxu0 0
        %412 = vmatpush1.bf16.msra.mxu0 %v403
        %413 = vmatprep.subr.bf16.mxu0 0
        %414 = vmatpush1.bf16.msra.mxu0 %v404
        %415 = vmatprep.subr.bf16.mxu0 0
        %416 = vmatpush1.bf16.msra.mxu0 0
        %417 = vmatprep.subr.bf16.mxu0 0
        %418 = vmatpush1.bf16.msra.mxu0 0
        %419 = vmatprep.subr.bf16.mxu0 0
        %420 = vmatpush1.bf16.msra.mxu0 0
        %421 = vmatprep.subr.bf16.mxu0 0
        %422 = vmatpush1.bf16.msra.mxu0 0
        %423 = vmatprep.subr.bf16.mxu0 0
        %424 = vmatpush1.bf16.msra.mxu0 0
        %425 = vmatprep.subr.bf16.mxu0 0
        %426 = vmatpush1.bf16.msra.mxu0 0
        %427 = vmatprep.subr.bf16.mxu0 0
        %428 = vmatpush1.bf16.msra.mxu0 0
        %429 = vmatprep.subr.bf16.mxu0 0
        %430 = vmatpush1.bf16.msra.mxu0 0
        %431 = vmatprep.subr.bf16.mxu0 0
        %432 = vmatpush1.bf16.msra.mxu0 0
        %433 = vmatprep.subr.bf16.mxu0 0
        %434 = vmatpush1.bf16.msra.mxu0 0
        %435 = vmatprep.subr.bf16.mxu0 0
        %436 = vmatpush1.bf16.msra.mxu0 0
        %437 = vmatprep.subr.bf16.mxu0 0
        %438 = vmatpush1.bf16.msra.mxu0 0
        %439 = vmatprep.subr.bf16.mxu0 0
        %440 = vmatpush1.bf16.msra.mxu0 0
        %441 = vmatprep.subr.bf16.mxu0 0
        %442 = vmatpush1.bf16.msra.mxu0 0
        %443 = vmatprep.mubr.bf16.mxu0 0
        %444 = vmatmul.mubr.bf16.gmra.mrb[0].mxu0 %v409
        %v445 = vpop.f32.mrb[0].mxu0
        %v446 = vadd.f32 0.0, %v445
        %v447 = vpop.f32.mrb[0].mxu0
        %v448 = vpop.f32.mrb[0].mxu0
        %v449 = vadd.f32 0.0, %v448
        %v450 = vpop.f32.mrb[0].mxu0
        %451 = vdwg.mxu0
        %v452 = vld [vmem:[%s308] sm:$0xff]
        %v453 = vld [vmem:[%s308 + $0x8] sm:$0xff]
        %vm454 = vcmp.eq.f32.partialorder %v452, 0.0
        %vm455 = vcmp.eq.f32.partialorder %v453, 0.0
        %v456 = vsel %vm454, 1, 0
        %v457 = vsel %vm455, 1, 0
        %458 = vrot.lane.b32.xlu0 %v456, 127
        %v459 = vpop.permute.xlu0 %458
        %460 = vrot.lane.b32.xlu0 %v457, 127
        %v461 = vpop.permute.xlu0 %460
        %vm462 = vcmp.ne.s32.totalorder %v459, 0
        %vm463 = vcmp.ne.s32.totalorder %v461, 0
        %vm464 = vmand %vm454, %vm462
        %vm465 = vmand %vm455, %vm463
        %468 = vrot.lane.b32.xlu0 %v452, 126
        %v469 = vpop.permute.xlu0 %468
        %470 = vrot.lane.b32.xlu0 %v453, 126
        %v471 = vpop.permute.xlu0 %470
        %v474 = vsub.f32 %v452, %v469
        %v475 = vsub.f32 %v453, %v471
        %v476 = vsel %vm464, 199999.0, %v474
        %v477 = vsel %vm465, 199999.0, %v475
        %480 = vrot.lane.b32.xlu0 %v474, 127
        %v481 = vpop.permute.xlu0 %480
        %482 = vrot.lane.b32.xlu0 %v475, 127
        %v483 = vpop.permute.xlu0 %482
        %v486 = vsel %vm464, 199999.0, %v481
        %v487 = vsel %vm465, 199999.0, %v483
        %v488 = vld [vmem:[#allocation10] ss:$0 sm:$0xff]
        %490 = vset.pattern.permute.xlu0 0
        %491 = vperm.xlu0 %490, %v476
        %v492 = vpop.permute.xlu0 %491
        %495 = vset.pattern.permute.xlu0 0
        %496 = vperm.xlu0 %495, %v477
        %v497 = vpop.permute.xlu0 %496
        %v499 = vmul.f32 %v492, %v488
        %v500 = vmul.f32 %v497, %v488
        %v501 = vld [vmem:[#allocation10 + $0x1] ss:$0 sm:$0xff]
        %503 = vset.pattern.permute.xlu0 0
        %504 = vperm.xlu0 %503, %v486
        %v505 = vpop.permute.xlu0 %504
        %508 = vset.pattern.permute.xlu0 0
        %509 = vperm.xlu0 %508, %v487
        %v510 = vpop.permute.xlu0 %509
        %v512 = vmul.f32 %v505, %v501
        %v513 = vmul.f32 %v510, %v501
        %v514 = vadd.f32 %v499, %v512
        %v515 = vadd.f32 %v500, %v513
        %516 = vst [vmem:[%s370] sm:$0xff] %v446
        %517 = vst [vmem:[%s370 + $0x8] sm:$0xff] %v514
        %518 = vst [vmem:[%s370 + $0x10] sm:$0xff] %v449
        %519 = vst [vmem:[%s370 + $0x18] sm:$0xff] %v515
        %p520 = scmp.eq.s32.totalorder %s29, 0
        // Predicated region
        $region61: #{tpu_custom_call.1} parent=39 // pred_check
          %p521 = pneg %p520
        $region62: #{tpu_custom_call.1} parent=39 // pred_check_branch
          %523 = sbr.rel (%p521) target = $region64
        $region63: #{tpu_custom_call.1} parent=39 // pred_region
          %524 = vst [vmem:[#allocation12] sm:$0xf] 0.0
        $region64: #{tpu_custom_call.1} parent=39 // pred_fallthru
          _
        %v525 = vadd.f32 %v446, %v449
        %v526 = vrot.slane %v525, 4
        %v527 = vadd.f32 %v525, %v526
        %v528 = vrot.slane %v527, 2
        %v529 = vadd.f32 %v527, %v528
        %v530 = vrot.slane %v529, 1
        %v531 = vadd.f32 %v529, %v530
        %v532 = vadd.f32 %v514, %v515
        %v533 = vrot.slane %v532, 4
        %v534 = vadd.f32 %v532, %v533
        %v535 = vrot.slane %v534, 2
        %v536 = vadd.f32 %v534, %v535
        %v537 = vrot.slane %v536, 1
        %v538 = vadd.f32 %v536, %v537
        %v539 = vmul.f32 %v446, %v446
        %v540 = vmul.f32 %v514, %v514
        %v541 = vmul.f32 %v449, %v449
        %v542 = vmul.f32 %v515, %v515
        %v543 = vadd.f32 %v539, %v541
        %v544 = vrot.slane %v543, 4
        %v545 = vadd.f32 %v543, %v544
        %v546 = vrot.slane %v545, 2
        %v547 = vadd.f32 %v545, %v546
        %v548 = vrot.slane %v547, 1
        %v549 = vadd.f32 %v547, %v548
        %v550 = vadd.f32 %v540, %v542
        %v551 = vrot.slane %v550, 4
        %v552 = vadd.f32 %v550, %v551
        %v553 = vrot.slane %v552, 2
        %v554 = vadd.f32 %v552, %v553
        %v555 = vrot.slane %v554, 1
        %v556 = vadd.f32 %v554, %v555
        %vm557 = vcmask 1040384
        %v558 = vsel %vm557, %v531, %v549
        %v559 = vsel %vm557, %v538, %v556
        %v560 = vld [vmem:[#allocation12] sm:$0xf]
        %v563 = vcombine.low %v558, %v559
        %v565 = vunpack.c.l.s4 1983009808
        %v566 = vunpack.c.0.s8 %v565
        %v567 = vlaneseq
        %v568 = vshrl.u32 %v567, 7
        %v569 = vsub.s32 %v566, %v568
        %v570 = vrot.slane %v563, %v569
        %v572 = vadd.f32 %v560, %v570
        %573 = vst [vmem:[#allocation12] sm:$0xf] %v572
        %p574 = scmp.eq.s32.totalorder %s29, 3
        // Predicated region
        $region65: #{tpu_custom_call.1} parent=39 // pred_check
          %p575 = pneg %p574
        $region66: #{tpu_custom_call.1} parent=39 // pred_check_branch
          %577 = sbr.rel (%p575) target = $region68
        $region67: #{tpu_custom_call.1} parent=39 // pred_region
          %v578 = vld [vmem:[#allocation12] ss:$2 sm:$0x3]
          %v579 = vmul.f32 %v578, 0.015625
          %s580 = scalar_lea.vmem [#allocation12], 1
          %v581 = vld [vmem:[%s580] ss:$2 sm:$0x3]
          %v582 = vmul.f32 %v581, 0.015625
          %v583 = vmul.f32 %v579, %v579
          %v584 = vsub.f32 %v582, %v583
          %v585 = vmax.f32 %v584, 0.0
          %s586 = scalar_lea.vmem [#allocation10], 2
          %v587 = vld [vmem:[%s586] ss:$8 sm:$0x3]
          %v588 = vadd.f32 %v585, 1e-05
          %v589 = vrsqrt.pop %v588
          %v590 = vmul.f32 %v587, %v589
          %s591 = scalar_lea.vmem [#allocation10], 3
          %v592 = vld [vmem:[%s591] ss:$8 sm:$0x3]
          %v593 = vmul.f32 %v579, %v590
          %v594 = vsub.f32 %v592, %v593
          %v596 = vlaneseq
          %v597 = vshrl.u32 %v596, 7
          %v598 = vsub.s32 0, %v597
          %v599 = vrot.slane %v590, %v598
          %v600 = vlaneseq
          %v601 = vshrl.u32 %v600, 7
          %v602 = vsub.s32 1, %v601
          %v603 = vrot.slane %v590, %v602
          %v607 = vlaneseq
          %v608 = vshrl.u32 %v607, 7
          %v609 = vsub.s32 0, %v608
          %v610 = vrot.slane %v594, %v609
          %v611 = vlaneseq
          %v612 = vshrl.u32 %v611, 7
          %v613 = vsub.s32 1, %v612
          %v614 = vrot.slane %v594, %v613
          %v617 = vsel %vm557, %v599, %v610
          %v618 = vsel %vm557, %v603, %v614
          %v621 = vcombine.low %v617, %v618
          %v623 = vunpack.c.l.s4 1983009808
          %v624 = vunpack.c.0.s8 %v623
          %v625 = vlaneseq
          %v626 = vshrl.u32 %v625, 7
          %v627 = vsub.s32 %v624, %v626
          %v628 = vrot.slane %v621, %v627
          %630 = vst [vmem:[#allocation12] sm:$0xf] %v628
        $region68: #{tpu_custom_call.1} parent=39 // pred_fallthru
          _
        %s631 = sand.u32 %s157, 1
        %s632 = scalar_lea.sflag [#allocation4], %s631
        %s633 = sand.u32 %s157, 1
        %s634 = smul.addr %s633, 32
        %s635 = scalar_lea.vmem [#allocation11], %s634
        // Predicated region
        $region69: #{tpu_custom_call.1} parent=39 // pred_check
          %p636 = pneg %p167
        $region70: #{tpu_custom_call.1} parent=39 // pred_check_branch
          %638 = sbr.rel (%p636) target = $region72
        $region71: #{tpu_custom_call.1} parent=39 // pred_region
          %s639 = smul.u32 2, %s29
          %s641 = ssub.s32 512, 512
          %642 = vsyncadd %s632, %s641
          %s643 = smul.addr %s639, 2
          %s644 = smul.addr %s643, 128
          %s645 = scalar_lea.hbm %s5, %s644
          %s646 = sshll.u32 %s635, 4
          %s647 = int_to_ptr.vmem [resolvable:$true] %s646
          %652 = dma.vmem_to_hbm [thread:$0]  %s647, 512, %s645, %s632, 256, 256, 16
        $region72: #{tpu_custom_call.1} parent=39 // pred_fallthru
          _
        // Predicated region
        $region73: #{tpu_custom_call.1} parent=39 // pred_check
          %p653 = pneg %p188
        $region74: #{tpu_custom_call.1} parent=39 // pred_check_branch
          %655 = sbr.rel (%p653) target = $region76
        $region75: #{tpu_custom_call.1} parent=39 // pred_region
          %s657 = ssub.s32 64, 64
          %658 = vsyncadd [#allocation13], %s657
          %s660 = sshll.u32 [#allocation12], 4
          %s661 = int_to_ptr.vmem [resolvable:$true] %s660
          %663 = dma.vmem_to_hbm [thread:$0]  %s661, 64, %s6, [#allocation13]
        $region76: #{tpu_custom_call.1} parent=39 // pred_fallthru
          _
        // Predicated region
        $region77: #{tpu_custom_call.1} parent=39 // pred_check
          %p664 = pneg %p188
        $region78: #{tpu_custom_call.1} parent=39 // pred_check_branch
          %666 = sbr.rel (%p664) target = $region80
        $region79: #{tpu_custom_call.1} parent=39 // pred_region
          %667 = dma.done [#allocation13], 64
        $region80: #{tpu_custom_call.1} parent=39 // pred_fallthru
          _
      $region40: #{tpu_custom_call.1} parent=5 // pred_fallthru
        _
      %p668 = scmp.le.s32.totalorder 2, %s24
      // Predicated region
      $region81: #{tpu_custom_call.1} parent=5 // pred_check
        %p669 = pneg %p668
      $region82: #{tpu_custom_call.1} parent=5 // pred_check_branch
        %671 = sbr.rel (%p669) target = $region84
      $region83: #{tpu_custom_call.1} parent=5 // pred_region
        %s672 = ssub.s32 %s24, 2
        // Predicated region
        $region85: #{tpu_custom_call.1} parent=83 // pred_check
          %p673 = pneg %p173
        $region86: #{tpu_custom_call.1} parent=83 // pred_check_branch
          %675 = sbr.rel (%p673) target = $region88
        $region87: #{tpu_custom_call.1} parent=83 // pred_region
          %s676 = sand.u32 %s158, 1
          %s677 = scalar_lea.sflag [#allocation4], %s676
          %s678 = sand.u32 %s158, 1
          %s679 = smul.addr %s678, 32
          %s680 = scalar_lea.vmem [#allocation11], %s679
          %681 = dma.done %s677, 512
        $region88: #{tpu_custom_call.1} parent=83 // pred_fallthru
          _
      $region84: #{tpu_custom_call.1} parent=5 // pred_fallthru
        _
    $region6: #{tpu_custom_call.1} parent=1 // loop_footer
      %s28 = sadd.s32 1, %s24
    $region7: #{tpu_custom_call.1} parent=1 // loop_footer_branch
      %23 = sbr.rel target = $region3
    $region8: #{tpu_custom_call.1} parent=1 // loop_exit
      _
    %682 = vsyncpa [#allocation3], 1
    %s683 = scalar_lea.sflag [#allocation3], 1
    %684 = vsyncpa %s683, 1
    %685 = vsyncpa [#allocation6], 1
    %s686 = scalar_lea.sflag [#allocation6], 1
    %687 = vsyncpa %s686, 1
    %688 = vsyncpa [#allocation9], 1
    %689 = vsyncpa [#allocation4], 1
    %s690 = scalar_lea.sflag [#allocation4], 1
    %691 = vsyncpa %s690, 1
    %692 = vsyncpa [#allocation13], 1

</llo_original>
